<compile_context>
chip_gen: v6e
topology: v6e:2x2x1
jax: 0.10.0
libtpu: 0.0.40
codegen_flags: <defaults>
</compile_context>

<pallas_src>
import functools

import jax
import jax.numpy as jnp
from jax import lax
from jax.experimental import pallas as pl
from jax.experimental.pallas import tpu as pltpu

KH = KW = 3          # kernel_size = 3, stride = 1, padding = 1
_CHUNK_ROWS = 8      # one sublane group per inner-loop step


def _dwconv_kernel(x_ref, w_ref, b_ref, o_ref, *, W: int):
    """Depthwise 3x3 conv on flattened (c, h, w) lanes with register-resident acc.

    x_ref: (nb, L)   one image per row, native (C, H, W) lane order (L padded to 128)
    w_ref: (72, L)   9 taps x 8 sublanes of boundary-masked per-channel weights
    b_ref: (8, L)    bias, pre-broadcast to 8 sublanes
    o_ref: (nb, L)
    """
    nb, L = x_ref.shape
    n_chunks = nb // _CHUNK_ROWS

    # Static lane shifts for the 9 taps (np.roll convention: out[p] = x[p + d]).
    shifts = []
    for kh in range(KH):
        for kw in range(KW):
            d = (kh - 1) * W + (kw - 1)
            shifts.append((-d) % L)

    bias = b_ref[...].astype(jnp.float32)               # hoisted, loop-invariant

    def chunk_body(c, carry):
        r0 = pl.multiple_of(c * _CHUNK_ROWS, _CHUNK_ROWS)
        x = x_ref[pl.ds(r0, _CHUNK_ROWS), :].astype(jnp.float32)
        acc = bias                                       # bias folded into acc init
        for t, shift in enumerate(shifts):
            xs = x if shift == 0 else pltpu.roll(x, shift, 1)   # XLU lane rotate
            w_t = w_ref[t * _CHUNK_ROWS:(t + 1) * _CHUNK_ROWS, :]
            acc = acc + xs * w_t                         # stays in vregs
        o_ref[pl.ds(r0, _CHUNK_ROWS), :] = acc.astype(o_ref.dtype)  # 1 store/vreg
        return carry

    lax.fori_loop(0, n_chunks, chunk_body, 0)


def _round_up(x: int, m: int) -> int:
    return (x + m - 1) // m * m


def _vmem_budget_bytes() -> int:
    """Generation-aware VMEM budget (conservative fallback if query fails)."""
    try:
        phys = int(pltpu.get_tpu_info().vmem_capacity_bytes)
    except Exception:
        phys = 64 * 1024 * 1024                 # assume v7x-class per-TC VMEM
    if phys <= 64 * 1024 * 1024:
        return 40 * 1024 * 1024                 # v7x: headroom under 64 MiB
    return 100 * 1024 * 1024                    # v5e / v6e: 128 MiB physical


def _pick_block_rows(n_rows: int, row_bytes: int, resident_bytes: int,
                     budget: int) -> int:
    """Largest multiple-of-8 divisor of n_rows whose live set fits the budget.

    Live set = 2 input blocks + 2 output blocks (double buffering) + resident
    planes.  The grid is only kept >= 2 steps (megacore sharding) when each step
    carries >= ~1 MiB of input rows.
    """
    usable = max(0, budget - resident_bytes - (2 << 20))       # slack for temps
    cap = max(8, (usable // (4 * row_bytes)) // 8 * 8)
    half = (n_rows // 2) // 8 * 8
    if half * row_bytes >= (1 << 20):
        cap = min(cap, half)
    cap = min(cap, n_rows)
    best = 8
    for d in range(8, cap + 1, 8):
        if n_rows % d == 0:
            best = d
    return best


def synapse_depthwise_conv(x_tbchw, weight, bias):
    """Forward pass of SYNAPSE_DEPTHWISE_CONV (sstep=False).

    x_tbchw: (T, B, C, H, W) float32
    weight : (C, 1, KH, KW)  float32 (PyTorch depthwise Conv2d weight layout)
    bias   : (C,)            float32
    returns: (T, B, C, H, W) float32
    """
    T, B, C, H, W = x_tbchw.shape
    N, L = T * B, C * H * W
    dtype = x_tbchw.dtype
    itemsize = jnp.dtype(dtype).itemsize

    Lp = _round_up(L, 128)    # keep the pltpu.roll fast path / unmasked vst
    Np = _round_up(N, 8)      # full sublane occupancy, (8,128)-legal blocks

    x2d = x_tbchw.reshape(N, L)               # pure reshape, native memory order
    if (Np, Lp) != (N, L):
        x2d = jnp.pad(x2d, ((0, Np - N), (0, Lp - L)))

    # Boundary-masked, per-channel weight planes; destination-side masks fold the
    # zero padding (and any roll wrap-around) into zero taps.  Pre-broadcast to 8
    # sublanes so in-kernel tap reads are plain vlds.
    hw = jnp.arange(H * W, dtype=jnp.int32)
    hh, ww = hw // W, hw % W
    w9 = weight.reshape(C, KH * KW).astype(jnp.float32)          # (C, 9)
    planes = []
    for kh in range(KH):
        for kw in range(KW):
            valid = ((hh + (kh - 1) >= 0) & (hh + (kh - 1) < H)
                     & (ww + (kw - 1) >= 0) & (ww + (kw - 1) < W))
            m = valid.astype(jnp.float32)                        # (H*W,)
            p = (w9[:, kh * KW + kw][:, None] * m[None, :]).reshape(L)
            planes.append(jnp.pad(p, (0, Lp - L)))
    wplanes = jnp.stack(planes, axis=0)                                   # (9, Lp)
    wplanes = jnp.broadcast_to(wplanes[:, None, :], (KH * KW, 8, Lp))
    wplanes = wplanes.reshape(KH * KW * 8, Lp)                            # (72, Lp)
    bflat = jnp.broadcast_to(bias.astype(jnp.float32)[:, None],
                             (C, H * W)).reshape(L)
    bplane = jnp.broadcast_to(jnp.pad(bflat, (0, Lp - L))[None, :], (8, Lp))

    resident = (KH * KW * 8 + 8) * Lp * 4      # VMEM-resident planes (f32)
    budget = _vmem_budget_bytes()
    nb = _pick_block_rows(Np, Lp * itemsize, resident, budget)
    grid = (Np // nb,)

    cost = pl.CostEstimate(
        flops=2 * KH * KW * Np * Lp,
        transcendentals=0,
        bytes_accessed=2 * Np * Lp * itemsize + resident,
    )

    out2d = pl.pallas_call(
        functools.partial(_dwconv_kernel, W=W),
        out_shape=jax.ShapeDtypeStruct((Np, Lp), dtype),
        grid_spec=pltpu.PrefetchScalarGridSpec(
            num_scalar_prefetch=0,
            grid=grid,
            in_specs=[
                pl.BlockSpec((nb, Lp), lambda n: (n, 0)),             # x rows (pipelined)
                pl.BlockSpec((KH * KW * 8, Lp), lambda n: (0, 0)),    # weight planes (resident)
                pl.BlockSpec((8, Lp), lambda n: (0, 0)),              # bias plane (resident)
            ],
            out_specs=pl.BlockSpec((nb, Lp), lambda n: (n, 0)),
        ),
        compiler_params=pltpu.CompilerParams(
            dimension_semantics=("parallel",),
            vmem_limit_bytes=budget,
        ),
        cost_estimate=cost,
    )(x2d, wplanes, bplane)

    if (Np, Lp) != (N, L):
        out2d = out2d[:N, :L]
    return out2d.reshape(T, B, C, H, W)


if __name__ == "__main__":
    # Small shapes consistent with the module: TIME=2, batch=2, channels=4, 16x16.
    T, B, C, H, W = 2, 2, 4, 16, 16

    key = jax.random.PRNGKey(0)
    kx, kw_, kb = jax.random.split(key, 3)
    x = jax.random.normal(kx, (T, B, C, H, W), dtype=jnp.float32)
    weight = jax.random.normal(kw_, (C, 1, KH, KW), dtype=jnp.float32) * 0.1
    bias = jax.random.normal(kb, (C,), dtype=jnp.float32) * 0.1

    out = synapse_depthwise_conv(x, weight, bias)
    out = jax.block_until_ready(out)

    # Reference: depthwise conv via lax (groups = C), matching PyTorch semantics.
    ref = jax.lax.conv_general_dilated(
        x.reshape(T * B, C, H, W),
        weight,
        window_strides=(1, 1),
        padding=((1, 1), (1, 1)),
        dimension_numbers=("NCHW", "OIHW", "NCHW"),
        feature_group_count=C,
    ) + bias.reshape(1, C, 1, 1)
    ref = ref.reshape(T, B, C, H, W)

    assert out.shape == (T, B, C, H, W)
    assert jnp.allclose(out, ref, atol=1e-5, rtol=1e-5)
    print("KERNEL_OK")
</pallas_src>

<mosaic_0001>
module attributes {stable_mosaic.version = 11 : i64} {
  func.func @_dwconv_kernel(%arg0: i32, %arg1: memref<8x1024xf32, #tpu.memory_space<vmem>>, %arg2: memref<72x1024xf32, #tpu.memory_space<vmem>>, %arg3: memref<8x1024xf32, #tpu.memory_space<vmem>>, %arg4: memref<8x1024xf32, #tpu.memory_space<vmem>>) attributes {dimension_semantics = [#tpu.dimension_semantics<parallel>], iteration_bounds = array<i64: 1>, scalar_prefetch = 0 : i64, scratch_operands = 0 : i64, tpu.core_type = #tpu.core_type<tc>, window_params = [{transform_indices = @transform_0, window_bounds = array<i64: 8, 1024>}, {pipeline_mode = #tpu.pipeline_mode<synchronous>, transform_indices = @transform_1, window_bounds = array<i64: 72, 1024>}, {pipeline_mode = #tpu.pipeline_mode<synchronous>, transform_indices = @transform_2, window_bounds = array<i64: 8, 1024>}, {transform_indices = @transform_3, window_bounds = array<i64: 8, 1024>}]} {
    %c0 = arith.constant 0 : index
    %c0_0 = arith.constant 0 : index
    %0 = vector.load %arg3[%c0, %c0_0] : memref<8x1024xf32, #tpu.memory_space<vmem>>, vector<8x1024xf32>
    %c0_i32 = arith.constant 0 : i32
    %c8_i32 = arith.constant 8 : i32
    %1 = arith.muli %c0_i32, %c8_i32 : i32
    %2 = tpu.assume_multiple %1, 8 : i32
    %3 = arith.index_cast %2 : i32 to index
    %c0_1 = arith.constant 0 : index
    %4 = vector.load %arg1[%3, %c0_1] : memref<8x1024xf32, #tpu.memory_space<vmem>>, vector<8x1024xf32>
    %c17_i32 = arith.constant 17 : i32
    %5 = tpu.dynamic_rotate %4 by %c17_i32 dim 1 : vector<8x1024xf32>, i32 -> vector<8x1024xf32>
    %c0_2 = arith.constant 0 : index
    %c0_3 = arith.constant 0 : index
    %6 = vector.load %arg2[%c0_2, %c0_3] : memref<72x1024xf32, #tpu.memory_space<vmem>>, vector<8x1024xf32>
    %7 = arith.mulf %5, %6 : vector<8x1024xf32>
    %8 = arith.addf %0, %7 : vector<8x1024xf32>
    %c16_i32 = arith.constant 16 : i32
    %9 = tpu.dynamic_rotate %4 by %c16_i32 dim 1 : vector<8x1024xf32>, i32 -> vector<8x1024xf32>
    %c8 = arith.constant 8 : index
    %c0_4 = arith.constant 0 : index
    %10 = vector.load %arg2[%c8, %c0_4] : memref<72x1024xf32, #tpu.memory_space<vmem>>, vector<8x1024xf32>
    %11 = arith.mulf %9, %10 : vector<8x1024xf32>
    %12 = arith.addf %8, %11 : vector<8x1024xf32>
    %c15_i32 = arith.constant 15 : i32
    %13 = tpu.dynamic_rotate %4 by %c15_i32 dim 1 : vector<8x1024xf32>, i32 -> vector<8x1024xf32>
    %c16 = arith.constant 16 : index
    %c0_5 = arith.constant 0 : index
    %14 = vector.load %arg2[%c16, %c0_5] : memref<72x1024xf32, #tpu.memory_space<vmem>>, vector<8x1024xf32>
    %15 = arith.mulf %13, %14 : vector<8x1024xf32>
    %16 = arith.addf %12, %15 : vector<8x1024xf32>
    %c1_i32 = arith.constant 1 : i32
    %17 = tpu.dynamic_rotate %4 by %c1_i32 dim 1 : vector<8x1024xf32>, i32 -> vector<8x1024xf32>
    %c24 = arith.constant 24 : index
    %c0_6 = arith.constant 0 : index
    %18 = vector.load %arg2[%c24, %c0_6] : memref<72x1024xf32, #tpu.memory_space<vmem>>, vector<8x1024xf32>
    %19 = arith.mulf %17, %18 : vector<8x1024xf32>
    %20 = arith.addf %16, %19 : vector<8x1024xf32>
    %c32 = arith.constant 32 : index
    %c0_7 = arith.constant 0 : index
    %21 = vector.load %arg2[%c32, %c0_7] : memref<72x1024xf32, #tpu.memory_space<vmem>>, vector<8x1024xf32>
    %22 = arith.mulf %4, %21 : vector<8x1024xf32>
    %23 = arith.addf %20, %22 : vector<8x1024xf32>
    %c1023_i32 = arith.constant 1023 : i32
    %24 = tpu.dynamic_rotate %4 by %c1023_i32 dim 1 : vector<8x1024xf32>, i32 -> vector<8x1024xf32>
    %c40 = arith.constant 40 : index
    %c0_8 = arith.constant 0 : index
    %25 = vector.load %arg2[%c40, %c0_8] : memref<72x1024xf32, #tpu.memory_space<vmem>>, vector<8x1024xf32>
    %26 = arith.mulf %24, %25 : vector<8x1024xf32>
    %27 = arith.addf %23, %26 : vector<8x1024xf32>
    %c1009_i32 = arith.constant 1009 : i32
    %28 = tpu.dynamic_rotate %4 by %c1009_i32 dim 1 : vector<8x1024xf32>, i32 -> vector<8x1024xf32>
    %c48 = arith.constant 48 : index
    %c0_9 = arith.constant 0 : index
    %29 = vector.load %arg2[%c48, %c0_9] : memref<72x1024xf32, #tpu.memory_space<vmem>>, vector<8x1024xf32>
    %30 = arith.mulf %28, %29 : vector<8x1024xf32>
    %31 = arith.addf %27, %30 : vector<8x1024xf32>
    %c1008_i32 = arith.constant 1008 : i32
    %32 = tpu.dynamic_rotate %4 by %c1008_i32 dim 1 : vector<8x1024xf32>, i32 -> vector<8x1024xf32>
    %c56 = arith.constant 56 : index
    %c0_10 = arith.constant 0 : index
    %33 = vector.load %arg2[%c56, %c0_10] : memref<72x1024xf32, #tpu.memory_space<vmem>>, vector<8x1024xf32>
    %34 = arith.mulf %32, %33 : vector<8x1024xf32>
    %35 = arith.addf %31, %34 : vector<8x1024xf32>
    %c1007_i32 = arith.constant 1007 : i32
    %36 = tpu.dynamic_rotate %4 by %c1007_i32 dim 1 : vector<8x1024xf32>, i32 -> vector<8x1024xf32>
    %c64 = arith.constant 64 : index
    %c0_11 = arith.constant 0 : index
    %37 = vector.load %arg2[%c64, %c0_11] : memref<72x1024xf32, #tpu.memory_space<vmem>>, vector<8x1024xf32>
    %38 = arith.mulf %36, %37 : vector<8x1024xf32>
    %39 = arith.addf %35, %38 : vector<8x1024xf32>
    %40 = arith.index_cast %2 : i32 to index
    %c0_12 = arith.constant 0 : index
    %41 = vector.load %arg4[%40, %c0_12] : memref<8x1024xf32, #tpu.memory_space<vmem>>, vector<8x1024xf32>
    tpu.vector_store %arg4[%40, %c0_12], %39 {strides = array<i32>} : memref<8x1024xf32, #tpu.memory_space<vmem>>, vector<8x1024xf32>,
    %c1_i32_13 = arith.constant 1 : i32
    return
  }
  func.func @transform_0(%arg0: i32) -> (i32, i32) {
    %c0_i32 = arith.constant 0 : i32
    %c0_i32_0 = arith.constant 0 : i32
    return %arg0, %c0_i32 : i32, i32
  }
  func.func @transform_1(%arg0: i32) -> (i32, i32) {
    %c0_i32 = arith.constant 0 : i32
    %c0_i32_0 = arith.constant 0 : i32
    %c0_i32_1 = arith.constant 0 : i32
    return %c0_i32, %c0_i32_0 : i32, i32
  }
  func.func @transform_2(%arg0: i32) -> (i32, i32) {
    %c0_i32 = arith.constant 0 : i32
    %c0_i32_0 = arith.constant 0 : i32
    %c0_i32_1 = arith.constant 0 : i32
    return %c0_i32, %c0_i32_0 : i32, i32
  }
  func.func @transform_3(%arg0: i32) -> (i32, i32) {
    %c0_i32 = arith.constant 0 : i32
    %c0_i32_0 = arith.constant 0 : i32
    return %arg0, %c0_i32 : i32, i32
  }
}

</mosaic_0001>

<llo_original>
// kernel: tpu_custom_call.1
$region0: #{tpu_custom_call.1}
  #allocation0 [shape = 'u32[]', space=smem, size = 0x4, offset = 0x4, fixed_abs, tag = 'smem constant byte address 0x4 - core index']
  #allocation1 [shape = 'u32[144,128]{1,0:T(1,128)}', space=vmem, size = 0x12000, scoped, tag = 'internal scratch']
  %s0 = inlined_call_operand.hbm [shape: f32[8,1024], index: 0, kind: input, shape index: {}]
  %s1 = inlined_call_operand.hbm [shape: f32[72,1024], index: 1, kind: input, shape index: {}]
  %s2 = inlined_call_operand.hbm [shape: f32[8,1024], index: 2, kind: input, shape index: {}]
  %s3 = inlined_call_operand.hbm [shape: f32[8,1024], index: 3, kind: output, shape index: {}]
  %s4 = sld [smem:[#allocation0]]
  $region34: #{tpu_custom_call.1} parent=0
    _
  %s6 = ssub.s32 1, %s4
  %s7 = scalar_select 0, %s6, %s4
  $region1: #{tpu_custom_call.1} parent=0
    #allocation2 [shape = 'u8[32768]{0}', space=vmem, size = 0x8000, scoped, tag = 'input window, operand 0, single buffered']
    #allocation3 [shape = 's32[1]{0}', space=sflag, size = 0x4, scoped, tag = 'scoped memory for tpu_custom_call.1']
    #allocation4 [shape = 's32[1]{0}', space=sflag, size = 0x4, scoped, tag = 'scoped memory for tpu_custom_call.1']
    #allocation5 [shape = 'u8[294912]{0}', space=vmem, size = 0x48000, scoped, tag = 'input window, operand 1, single buffered']
    #allocation6 [shape = 's32[1]{0}', space=sflag, size = 0x4, scoped, tag = 'scoped memory for tpu_custom_call.1']
    #allocation7 [shape = 'u8[32768]{0}', space=vmem, size = 0x8000, scoped, tag = 'input window, operand 2, single buffered']
    #allocation8 [shape = 'u8[32768]{0}', space=vmem, size = 0x8000, scoped, tag = 'output window, operand 0, single buffered']
    %8 = vsyncpa [#allocation3], 0
    %9 = vsyncpa [#allocation6], 0
    %10 = vsyncpa [#allocation4], 0
    // Predicated region
    $region2: #{tpu_custom_call.1} parent=1 // pred_check
      _
    $region3: #{tpu_custom_call.1} parent=1 // pred_check_branch
      %12 = sbr.rel (0) target = $region5
    $region4: #{tpu_custom_call.1} parent=1 // pred_region
      %s14 = ssub.s32 1024, 1024
      %15 = vsyncadd [#allocation3], %s14
      %s17 = sshll.u32 [#allocation2], 4
      %s18 = int_to_ptr.vmem [resolvable:$true] %s17
      %20 = dma.hbm_to_vmem [thread:$0]  %s0, 1024, %s18, [#allocation3]
    $region5: #{tpu_custom_call.1} parent=1 // pred_fallthru
      _
    // Predicated region
    $region6: #{tpu_custom_call.1} parent=1 // pred_check
      _
    $region7: #{tpu_custom_call.1} parent=1 // pred_check_branch
      %22 = sbr.rel (0) target = $region9
    $region8: #{tpu_custom_call.1} parent=1 // pred_region
      %s24 = ssub.s32 9216, 9216
      %25 = vsyncadd [#allocation6], %s24
      %s26 = sshll.u32 [#allocation5], 4
      %s27 = int_to_ptr.vmem [resolvable:$true] %s26
      %32 = dma.hbm_to_vmem [thread:$0]  %s1, 9216, %s27, [#allocation6], 1024, 1024, 64
    $region9: #{tpu_custom_call.1} parent=1 // pred_fallthru
      _
    // Predicated region
    $region10: #{tpu_custom_call.1} parent=1 // pred_check
      _
    $region11: #{tpu_custom_call.1} parent=1 // pred_check_branch
      %34 = sbr.rel (0) target = $region13
    $region12: #{tpu_custom_call.1} parent=1 // pred_region
      %s36 = ssub.s32 1024, 1024
      %37 = vsyncadd [#allocation6], %s36
      %s39 = sshll.u32 [#allocation7], 4
      %s40 = int_to_ptr.vmem [resolvable:$true] %s39
      %42 = dma.hbm_to_vmem [thread:$0]  %s2, 1024, %s40, [#allocation6]
    $region13: #{tpu_custom_call.1} parent=1 // pred_fallthru
      _
    // Predicated region
    $region14: #{tpu_custom_call.1} parent=1 // pred_check
      _
    $region15: #{tpu_custom_call.1} parent=1 // pred_check_branch
      %44 = sbr.rel (0) target = $region17
    $region16: #{tpu_custom_call.1} parent=1 // pred_region
      %45 = dma.done [#allocation3], 1024
    $region17: #{tpu_custom_call.1} parent=1 // pred_fallthru
      _
    // Predicated region
    $region18: #{tpu_custom_call.1} parent=1 // pred_check
      _
    $region19: #{tpu_custom_call.1} parent=1 // pred_check_branch
      %47 = sbr.rel (0) target = $region21
    $region20: #{tpu_custom_call.1} parent=1 // pred_region
      %48 = dma.done [#allocation6], 9216
    $region21: #{tpu_custom_call.1} parent=1 // pred_fallthru
      _
    // Predicated region
    $region22: #{tpu_custom_call.1} parent=1 // pred_check
      _
    $region23: #{tpu_custom_call.1} parent=1 // pred_check_branch
      %50 = sbr.rel (0) target = $region25
    $region24: #{tpu_custom_call.1} parent=1 // pred_region
      %51 = dma.done [#allocation6], 1024
    $region25: #{tpu_custom_call.1} parent=1 // pred_fallthru
      _
    %v52 = vld [vmem:[#allocation7] sm:$0xff]
    %v53 = vld [vmem:[#allocation7 + $0x8] sm:$0xff]
    %v54 = vld [vmem:[#allocation7 + $0x10] sm:$0xff]
    %v55 = vld [vmem:[#allocation7 + $0x18] sm:$0xff]
    %v56 = vld [vmem:[#allocation7 + $0x20] sm:$0xff]
    %v57 = vld [vmem:[#allocation7 + $0x28] sm:$0xff]
    %v58 = vld [vmem:[#allocation7 + $0x30] sm:$0xff]
    %v59 = vld [vmem:[#allocation7 + $0x38] sm:$0xff]
    %s60 = smul.u32 0, 8
    %s61 = smul.addr %s60, 8
    %s62 = scalar_lea.vmem [#allocation2], %s61
    %v63 = vld [vmem:[%s62] sm:$0xff]
    %v64 = vld [vmem:[%s62 + $0x8] sm:$0xff]
    %v65 = vld [vmem:[%s62 + $0x10] sm:$0xff]
    %v66 = vld [vmem:[%s62 + $0x18] sm:$0xff]
    %v67 = vld [vmem:[%s62 + $0x20] sm:$0xff]
    %v68 = vld [vmem:[%s62 + $0x28] sm:$0xff]
    %v69 = vld [vmem:[%s62 + $0x30] sm:$0xff]
    %v70 = vld [vmem:[%s62 + $0x38] sm:$0xff]
    %71 = vrot.lane.b32.xlu0 %v63, 17
    %v72 = vpop.permute.xlu0 %71
    %73 = vrot.lane.b32.xlu0 %v64, 17
    %v74 = vpop.permute.xlu0 %73
    %75 = vrot.lane.b32.xlu0 %v65, 17
    %v76 = vpop.permute.xlu0 %75
    %77 = vrot.lane.b32.xlu0 %v66, 17
    %v78 = vpop.permute.xlu0 %77
    %79 = vrot.lane.b32.xlu0 %v67, 17
    %v80 = vpop.permute.xlu0 %79
    %81 = vrot.lane.b32.xlu0 %v68, 17
    %v82 = vpop.permute.xlu0 %81
    %83 = vrot.lane.b32.xlu0 %v69, 17
    %v84 = vpop.permute.xlu0 %83
    %85 = vrot.lane.b32.xlu0 %v70, 17
    %v86 = vpop.permute.xlu0 %85
    %v87 = vlaneseq
    %v88 = vand.u32 %v87, 127
    %vm89 = vcmp.lt.s32.totalorder %v88, 17
    %v90 = vsel %vm89, %v84, %v86
    %v91 = vsel %vm89, %v82, %v84
    %v92 = vsel %vm89, %v80, %v82
    %v93 = vsel %vm89, %v78, %v80
    %v94 = vsel %vm89, %v76, %v78
    %v95 = vsel %vm89, %v74, %v76
    %v96 = vsel %vm89, %v72, %v74
    %v97 = vsel %vm89, %v86, %v72
    %v98 = vld [vmem:[#allocation5] sm:$0xff]
    %v99 = vld [vmem:[#allocation5 + $0x8] sm:$0xff]
    %v100 = vld [vmem:[#allocation5 + $0x10] sm:$0xff]
    %v101 = vld [vmem:[#allocation5 + $0x18] sm:$0xff]
    %v102 = vld [vmem:[#allocation5 + $0x20] sm:$0xff]
    %v103 = vld [vmem:[#allocation5 + $0x28] sm:$0xff]
    %v104 = vld [vmem:[#allocation5 + $0x30] sm:$0xff]
    %v105 = vld [vmem:[#allocation5 + $0x38] sm:$0xff]
    %v106 = vmul.f32 %v97, %v98
    %v107 = vmul.f32 %v96, %v99
    %v108 = vmul.f32 %v95, %v100
    %v109 = vmul.f32 %v94, %v101
    %v110 = vmul.f32 %v93, %v102
    %v111 = vmul.f32 %v92, %v103
    %v112 = vmul.f32 %v91, %v104
    %v113 = vmul.f32 %v90, %v105
    %v114 = vadd.f32 %v52, %v106
    %v115 = vadd.f32 %v53, %v107
    %v116 = vadd.f32 %v54, %v108
    %v117 = vadd.f32 %v55, %v109
    %v118 = vadd.f32 %v56, %v110
    %v119 = vadd.f32 %v57, %v111
    %v120 = vadd.f32 %v58, %v112
    %v121 = vadd.f32 %v59, %v113
    %122 = vrot.lane.b32.xlu0 %v63, 16
    %v123 = vpop.permute.xlu0 %122
    %124 = vrot.lane.b32.xlu0 %v64, 16
    %v125 = vpop.permute.xlu0 %124
    %126 = vrot.lane.b32.xlu0 %v65, 16
    %v127 = vpop.permute.xlu0 %126
    %128 = vrot.lane.b32.xlu0 %v66, 16
    %v129 = vpop.permute.xlu0 %128
    %130 = vrot.lane.b32.xlu0 %v67, 16
    %v131 = vpop.permute.xlu0 %130
    %132 = vrot.lane.b32.xlu0 %v68, 16
    %v133 = vpop.permute.xlu0 %132
    %134 = vrot.lane.b32.xlu0 %v69, 16
    %v135 = vpop.permute.xlu0 %134
    %136 = vrot.lane.b32.xlu0 %v70, 16
    %v137 = vpop.permute.xlu0 %136
    %vm138 = vcmp.lt.s32.totalorder %v88, 16
    %v139 = vsel %vm138, %v135, %v137
    %v140 = vsel %vm138, %v133, %v135
    %v141 = vsel %vm138, %v131, %v133
    %v142 = vsel %vm138, %v129, %v131
    %v143 = vsel %vm138, %v127, %v129
    %v144 = vsel %vm138, %v125, %v127
    %v145 = vsel %vm138, %v123, %v125
    %v146 = vsel %vm138, %v137, %v123
    %v147 = vld [vmem:[#allocation5 + $0x40] sm:$0xff]
    %v148 = vld [vmem:[#allocation5 + $0x48] sm:$0xff]
    %v149 = vld [vmem:[#allocation5 + $0x50] sm:$0xff]
    %v150 = vld [vmem:[#allocation5 + $0x58] sm:$0xff]
    %v151 = vld [vmem:[#allocation5 + $0x60] sm:$0xff]
    %v152 = vld [vmem:[#allocation5 + $0x68] sm:$0xff]
    %v153 = vld [vmem:[#allocation5 + $0x70] sm:$0xff]
    %v154 = vld [vmem:[#allocation5 + $0x78] sm:$0xff]
    %v155 = vmul.f32 %v146, %v147
    %v156 = vmul.f32 %v145, %v148
    %v157 = vmul.f32 %v144, %v149
    %v158 = vmul.f32 %v143, %v150
    %v159 = vmul.f32 %v142, %v151
    %v160 = vmul.f32 %v141, %v152
    %v161 = vmul.f32 %v140, %v153
    %v162 = vmul.f32 %v139, %v154
    %v163 = vadd.f32 %v114, %v155
    %v164 = vadd.f32 %v115, %v156
    %v165 = vadd.f32 %v116, %v157
    %v166 = vadd.f32 %v117, %v158
    %v167 = vadd.f32 %v118, %v159
    %v168 = vadd.f32 %v119, %v160
    %v169 = vadd.f32 %v120, %v161
    %v170 = vadd.f32 %v121, %v162
    %171 = vrot.lane.b32.xlu0 %v63, 15
    %v172 = vpop.permute.xlu0 %171
    %173 = vrot.lane.b32.xlu0 %v64, 15
    %v174 = vpop.permute.xlu0 %173
    %175 = vrot.lane.b32.xlu0 %v65, 15
    %v176 = vpop.permute.xlu0 %175
    %177 = vrot.lane.b32.xlu0 %v66, 15
    %v178 = vpop.permute.xlu0 %177
    %179 = vrot.lane.b32.xlu0 %v67, 15
    %v180 = vpop.permute.xlu0 %179
    %181 = vrot.lane.b32.xlu0 %v68, 15
    %v182 = vpop.permute.xlu0 %181
    %183 = vrot.lane.b32.xlu0 %v69, 15
    %v184 = vpop.permute.xlu0 %183
    %185 = vrot.lane.b32.xlu0 %v70, 15
    %v186 = vpop.permute.xlu0 %185
    %vm187 = vcmp.lt.s32.totalorder %v88, 15
    %v188 = vsel %vm187, %v184, %v186
    %v189 = vsel %vm187, %v182, %v184
    %v190 = vsel %vm187, %v180, %v182
    %v191 = vsel %vm187, %v178, %v180
    %v192 = vsel %vm187, %v176, %v178
    %v193 = vsel %vm187, %v174, %v176
    %v194 = vsel %vm187, %v172, %v174
    %v195 = vsel %vm187, %v186, %v172
    %v196 = vld [vmem:[#allocation5 + $0x80] sm:$0xff]
    %v197 = vld [vmem:[#allocation5 + $0x88] sm:$0xff]
    %v198 = vld [vmem:[#allocation5 + $0x90] sm:$0xff]
    %v199 = vld [vmem:[#allocation5 + $0x98] sm:$0xff]
    %v200 = vld [vmem:[#allocation5 + $0xa0] sm:$0xff]
    %v201 = vld [vmem:[#allocation5 + $0xa8] sm:$0xff]
    %v202 = vld [vmem:[#allocation5 + $0xb0] sm:$0xff]
    %v203 = vld [vmem:[#allocation5 + $0xb8] sm:$0xff]
    %v204 = vmul.f32 %v195, %v196
    %v205 = vmul.f32 %v194, %v197
    %v206 = vmul.f32 %v193, %v198
    %v207 = vmul.f32 %v192, %v199
    %v208 = vmul.f32 %v191, %v200
    %v209 = vmul.f32 %v190, %v201
    %v210 = vmul.f32 %v189, %v202
    %v211 = vmul.f32 %v188, %v203
    %v212 = vadd.f32 %v163, %v204
    %v213 = vadd.f32 %v164, %v205
    %v214 = vadd.f32 %v165, %v206
    %v215 = vadd.f32 %v166, %v207
    %v216 = vadd.f32 %v167, %v208
    %v217 = vadd.f32 %v168, %v209
    %v218 = vadd.f32 %v169, %v210
    %v219 = vadd.f32 %v170, %v211
    %220 = vrot.lane.b32.xlu0 %v63, 1
    %v221 = vpop.permute.xlu0 %220
    %222 = vrot.lane.b32.xlu0 %v64, 1
    %v223 = vpop.permute.xlu0 %222
    %224 = vrot.lane.b32.xlu0 %v65, 1
    %v225 = vpop.permute.xlu0 %224
    %226 = vrot.lane.b32.xlu0 %v66, 1
    %v227 = vpop.permute.xlu0 %226
    %228 = vrot.lane.b32.xlu0 %v67, 1
    %v229 = vpop.permute.xlu0 %228
    %230 = vrot.lane.b32.xlu0 %v68, 1
    %v231 = vpop.permute.xlu0 %230
    %232 = vrot.lane.b32.xlu0 %v69, 1
    %v233 = vpop.permute.xlu0 %232
    %234 = vrot.lane.b32.xlu0 %v70, 1
    %v235 = vpop.permute.xlu0 %234
    %vm236 = vcmp.lt.s32.totalorder %v88, 1
    %v237 = vsel %vm236, %v233, %v235
    %v238 = vsel %vm236, %v231, %v233
    %v239 = vsel %vm236, %v229, %v231
    %v240 = vsel %vm236, %v227, %v229
    %v241 = vsel %vm236, %v225, %v227
    %v242 = vsel %vm236, %v223, %v225
    %v243 = vsel %vm236, %v221, %v223
    %v244 = vsel %vm236, %v235, %v221
    %v245 = vld [vmem:[#allocation5 + $0xc0] sm:$0xff]
    %v246 = vld [vmem:[#allocation5 + $0xc8] sm:$0xff]
    %v247 = vld [vmem:[#allocation5 + $0xd0] sm:$0xff]
    %v248 = vld [vmem:[#allocation5 + $0xd8] sm:$0xff]
    %v249 = vld [vmem:[#allocation5 + $0xe0] sm:$0xff]
    %v250 = vld [vmem:[#allocation5 + $0xe8] sm:$0xff]
    %v251 = vld [vmem:[#allocation5 + $0xf0] sm:$0xff]
    %v252 = vld [vmem:[#allocation5 + $0xf8] sm:$0xff]
    %v253 = vmul.f32 %v244, %v245
    %v254 = vmul.f32 %v243, %v246
    %v255 = vmul.f32 %v242, %v247
    %v256 = vmul.f32 %v241, %v248
    %v257 = vmul.f32 %v240, %v249
    %v258 = vmul.f32 %v239, %v250
    %v259 = vmul.f32 %v238, %v251
    %v260 = vmul.f32 %v237, %v252
    %v261 = vadd.f32 %v212, %v253
    %v262 = vadd.f32 %v213, %v254
    %v263 = vadd.f32 %v214, %v255
    %v264 = vadd.f32 %v215, %v256
    %v265 = vadd.f32 %v216, %v257
    %v266 = vadd.f32 %v217, %v258
    %v267 = vadd.f32 %v218, %v259
    %v268 = vadd.f32 %v219, %v260
    %v269 = vld [vmem:[#allocation5 + $0x100] sm:$0xff]
    %v270 = vld [vmem:[#allocation5 + $0x108] sm:$0xff]
    %v271 = vld [vmem:[#allocation5 + $0x110] sm:$0xff]
    %v272 = vld [vmem:[#allocation5 + $0x118] sm:$0xff]
    %v273 = vld [vmem:[#allocation5 + $0x120] sm:$0xff]
    %v274 = vld [vmem:[#allocation5 + $0x128] sm:$0xff]
    %v275 = vld [vmem:[#allocation5 + $0x130] sm:$0xff]
    %v276 = vld [vmem:[#allocation5 + $0x138] sm:$0xff]
    %v277 = vmul.f32 %v63, %v269
    %v278 = vmul.f32 %v64, %v270
    %v279 = vmul.f32 %v65, %v271
    %v280 = vmul.f32 %v66, %v272
    %v281 = vmul.f32 %v67, %v273
    %v282 = vmul.f32 %v68, %v274
    %v283 = vmul.f32 %v69, %v275
    %v284 = vmul.f32 %v70, %v276
    %v285 = vadd.f32 %v261, %v277
    %v286 = vadd.f32 %v262, %v278
    %v287 = vadd.f32 %v263, %v279
    %v288 = vadd.f32 %v264, %v280
    %v289 = vadd.f32 %v265, %v281
    %v290 = vadd.f32 %v266, %v282
    %v291 = vadd.f32 %v267, %v283
    %v292 = vadd.f32 %v268, %v284
    %293 = vrot.lane.b32.xlu0 %v63, 127
    %v294 = vpop.permute.xlu0 %293
    %295 = vrot.lane.b32.xlu0 %v64, 127
    %v296 = vpop.permute.xlu0 %295
    %297 = vrot.lane.b32.xlu0 %v65, 127
    %v298 = vpop.permute.xlu0 %297
    %299 = vrot.lane.b32.xlu0 %v66, 127
    %v300 = vpop.permute.xlu0 %299
    %301 = vrot.lane.b32.xlu0 %v67, 127
    %v302 = vpop.permute.xlu0 %301
    %303 = vrot.lane.b32.xlu0 %v68, 127
    %v304 = vpop.permute.xlu0 %303
    %305 = vrot.lane.b32.xlu0 %v69, 127
    %v306 = vpop.permute.xlu0 %305
    %307 = vrot.lane.b32.xlu0 %v70, 127
    %v308 = vpop.permute.xlu0 %307
    %vm309 = vcmp.lt.s32.totalorder %v88, 127
    %v310 = vsel %vm309, %v306, %v308
    %v311 = vsel %vm309, %v304, %v306
    %v312 = vsel %vm309, %v302, %v304
    %v313 = vsel %vm309, %v300, %v302
    %v314 = vsel %vm309, %v298, %v300
    %v315 = vsel %vm309, %v296, %v298
    %v316 = vsel %vm309, %v294, %v296
    %v317 = vsel %vm309, %v308, %v294
    %v318 = vld [vmem:[#allocation5 + $0x140] sm:$0xff]
    %v319 = vld [vmem:[#allocation5 + $0x148] sm:$0xff]
    %v320 = vld [vmem:[#allocation5 + $0x150] sm:$0xff]
    %v321 = vld [vmem:[#allocation5 + $0x158] sm:$0xff]
    %v322 = vld [vmem:[#allocation5 + $0x160] sm:$0xff]
    %v323 = vld [vmem:[#allocation5 + $0x168] sm:$0xff]
    %v324 = vld [vmem:[#allocation5 + $0x170] sm:$0xff]
    %v325 = vld [vmem:[#allocation5 + $0x178] sm:$0xff]
    %v326 = vmul.f32 %v316, %v318
    %v327 = vmul.f32 %v315, %v319
    %v328 = vmul.f32 %v314, %v320
    %v329 = vmul.f32 %v313, %v321
    %v330 = vmul.f32 %v312, %v322
    %v331 = vmul.f32 %v311, %v323
    %v332 = vmul.f32 %v310, %v324
    %v333 = vmul.f32 %v317, %v325
    %v334 = vadd.f32 %v285, %v326
    %v335 = vadd.f32 %v286, %v327
    %v336 = vadd.f32 %v287, %v328
    %v337 = vadd.f32 %v288, %v329
    %v338 = vadd.f32 %v289, %v330
    %v339 = vadd.f32 %v290, %v331
    %v340 = vadd.f32 %v291, %v332
    %v341 = vadd.f32 %v292, %v333
    %342 = vrot.lane.b32.xlu0 %v63, 113
    %v343 = vpop.permute.xlu0 %342
    %344 = vrot.lane.b32.xlu0 %v64, 113
    %v345 = vpop.permute.xlu0 %344
    %346 = vrot.lane.b32.xlu0 %v65, 113
    %v347 = vpop.permute.xlu0 %346
    %348 = vrot.lane.b32.xlu0 %v66, 113
    %v349 = vpop.permute.xlu0 %348
    %350 = vrot.lane.b32.xlu0 %v67, 113
    %v351 = vpop.permute.xlu0 %350
    %352 = vrot.lane.b32.xlu0 %v68, 113
    %v353 = vpop.permute.xlu0 %352
    %354 = vrot.lane.b32.xlu0 %v69, 113
    %v355 = vpop.permute.xlu0 %354
    %356 = vrot.lane.b32.xlu0 %v70, 113
    %v357 = vpop.permute.xlu0 %356
    %vm358 = vcmp.lt.s32.totalorder %v88, 113
    %v359 = vsel %vm358, %v355, %v357
    %v360 = vsel %vm358, %v353, %v355
    %v361 = vsel %vm358, %v351, %v353
    %v362 = vsel %vm358, %v349, %v351
    %v363 = vsel %vm358, %v347, %v349
    %v364 = vsel %vm358, %v345, %v347
    %v365 = vsel %vm358, %v343, %v345
    %v366 = vsel %vm358, %v357, %v343
    %v367 = vld [vmem:[#allocation5 + $0x180] sm:$0xff]
    %v368 = vld [vmem:[#allocation5 + $0x188] sm:$0xff]
    %v369 = vld [vmem:[#allocation5 + $0x190] sm:$0xff]
    %v370 = vld [vmem:[#allocation5 + $0x198] sm:$0xff]
    %v371 = vld [vmem:[#allocation5 + $0x1a0] sm:$0xff]
    %v372 = vld [vmem:[#allocation5 + $0x1a8] sm:$0xff]
    %v373 = vld [vmem:[#allocation5 + $0x1b0] sm:$0xff]
    %v374 = vld [vmem:[#allocation5 + $0x1b8] sm:$0xff]
    %v375 = vmul.f32 %v365, %v367
    %v376 = vmul.f32 %v364, %v368
    %v377 = vmul.f32 %v363, %v369
    %v378 = vmul.f32 %v362, %v370
    %v379 = vmul.f32 %v361, %v371
    %v380 = vmul.f32 %v360, %v372
    %v381 = vmul.f32 %v359, %v373
    %v382 = vmul.f32 %v366, %v374
    %v383 = vadd.f32 %v334, %v375
    %v384 = vadd.f32 %v335, %v376
    %v385 = vadd.f32 %v336, %v377
    %v386 = vadd.f32 %v337, %v378
    %v387 = vadd.f32 %v338, %v379
    %v388 = vadd.f32 %v339, %v380
    %v389 = vadd.f32 %v340, %v381
    %v390 = vadd.f32 %v341, %v382
    %391 = vrot.lane.b32.xlu0 %v63, 112
    %v392 = vpop.permute.xlu0 %391
    %393 = vrot.lane.b32.xlu0 %v64, 112
    %v394 = vpop.permute.xlu0 %393
    %395 = vrot.lane.b32.xlu0 %v65, 112
    %v396 = vpop.permute.xlu0 %395
    %397 = vrot.lane.b32.xlu0 %v66, 112
    %v398 = vpop.permute.xlu0 %397
    %399 = vrot.lane.b32.xlu0 %v67, 112
    %v400 = vpop.permute.xlu0 %399
    %401 = vrot.lane.b32.xlu0 %v68, 112
    %v402 = vpop.permute.xlu0 %401
    %403 = vrot.lane.b32.xlu0 %v69, 112
    %v404 = vpop.permute.xlu0 %403
    %405 = vrot.lane.b32.xlu0 %v70, 112
    %v406 = vpop.permute.xlu0 %405
    %vm407 = vcmp.lt.s32.totalorder %v88, 112
    %v408 = vsel %vm407, %v404, %v406
    %v409 = vsel %vm407, %v402, %v404
    %v410 = vsel %vm407, %v400, %v402
    %v411 = vsel %vm407, %v398, %v400
    %v412 = vsel %vm407, %v396, %v398
    %v413 = vsel %vm407, %v394, %v396
    %v414 = vsel %vm407, %v392, %v394
    %v415 = vsel %vm407, %v406, %v392
    %v416 = vld [vmem:[#allocation5 + $0x1c0] sm:$0xff]
    %v417 = vld [vmem:[#allocation5 + $0x1c8] sm:$0xff]
    %v418 = vld [vmem:[#allocation5 + $0x1d0] sm:$0xff]
    %v419 = vld [vmem:[#allocation5 + $0x1d8] sm:$0xff]
    %v420 = vld [vmem:[#allocation5 + $0x1e0] sm:$0xff]
    %v421 = vld [vmem:[#allocation5 + $0x1e8] sm:$0xff]
    %v422 = vld [vmem:[#allocation5 + $0x1f0] sm:$0xff]
    %v423 = vld [vmem:[#allocation5 + $0x1f8] sm:$0xff]
    %v424 = vmul.f32 %v414, %v416
    %v425 = vmul.f32 %v413, %v417
    %v426 = vmul.f32 %v412, %v418
    %v427 = vmul.f32 %v411, %v419
    %v428 = vmul.f32 %v410, %v420
    %v429 = vmul.f32 %v409, %v421
    %v430 = vmul.f32 %v408, %v422
    %v431 = vmul.f32 %v415, %v423
    %v432 = vadd.f32 %v383, %v424
    %v433 = vadd.f32 %v384, %v425
    %v434 = vadd.f32 %v385, %v426
    %v435 = vadd.f32 %v386, %v427
    %v436 = vadd.f32 %v387, %v428
    %v437 = vadd.f32 %v388, %v429
    %v438 = vadd.f32 %v389, %v430
    %v439 = vadd.f32 %v390, %v431
    %440 = vrot.lane.b32.xlu0 %v63, 111
    %v441 = vpop.permute.xlu0 %440
    %442 = vrot.lane.b32.xlu0 %v64, 111
    %v443 = vpop.permute.xlu0 %442
    %444 = vrot.lane.b32.xlu0 %v65, 111
    %v445 = vpop.permute.xlu0 %444
    %446 = vrot.lane.b32.xlu0 %v66, 111
    %v447 = vpop.permute.xlu0 %446
    %448 = vrot.lane.b32.xlu0 %v67, 111
    %v449 = vpop.permute.xlu0 %448
    %450 = vrot.lane.b32.xlu0 %v68, 111
    %v451 = vpop.permute.xlu0 %450
    %452 = vrot.lane.b32.xlu0 %v69, 111
    %v453 = vpop.permute.xlu0 %452
    %454 = vrot.lane.b32.xlu0 %v70, 111
    %v455 = vpop.permute.xlu0 %454
    %vm456 = vcmp.lt.s32.totalorder %v88, 111
    %v457 = vsel %vm456, %v453, %v455
    %v458 = vsel %vm456, %v451, %v453
    %v459 = vsel %vm456, %v449, %v451
    %v460 = vsel %vm456, %v447, %v449
    %v461 = vsel %vm456, %v445, %v447
    %v462 = vsel %vm456, %v443, %v445
    %v463 = vsel %vm456, %v441, %v443
    %v464 = vsel %vm456, %v455, %v441
    %v465 = vld [vmem:[#allocation5 + $0x200] sm:$0xff]
    %v466 = vld [vmem:[#allocation5 + $0x208] sm:$0xff]
    %v467 = vld [vmem:[#allocation5 + $0x210] sm:$0xff]
    %v468 = vld [vmem:[#allocation5 + $0x218] sm:$0xff]
    %v469 = vld [vmem:[#allocation5 + $0x220] sm:$0xff]
    %v470 = vld [vmem:[#allocation5 + $0x228] sm:$0xff]
    %v471 = vld [vmem:[#allocation5 + $0x230] sm:$0xff]
    %v472 = vld [vmem:[#allocation5 + $0x238] sm:$0xff]
    %v473 = vmul.f32 %v463, %v465
    %v474 = vmul.f32 %v462, %v466
    %v475 = vmul.f32 %v461, %v467
    %v476 = vmul.f32 %v460, %v468
    %v477 = vmul.f32 %v459, %v469
    %v478 = vmul.f32 %v458, %v470
    %v479 = vmul.f32 %v457, %v471
    %v480 = vmul.f32 %v464, %v472
    %v481 = vadd.f32 %v432, %v473
    %v482 = vadd.f32 %v433, %v474
    %v483 = vadd.f32 %v434, %v475
    %v484 = vadd.f32 %v435, %v476
    %v485 = vadd.f32 %v436, %v477
    %v486 = vadd.f32 %v437, %v478
    %v487 = vadd.f32 %v438, %v479
    %v488 = vadd.f32 %v439, %v480
    %s489 = smul.addr %s60, 8
    %s490 = scalar_lea.vmem [#allocation8], %s489
    %491 = vst [vmem:[%s490] sm:$0xff] %v481
    %492 = vst [vmem:[%s490 + $0x8] sm:$0xff] %v482
    %493 = vst [vmem:[%s490 + $0x10] sm:$0xff] %v483
    %494 = vst [vmem:[%s490 + $0x18] sm:$0xff] %v484
    %495 = vst [vmem:[%s490 + $0x20] sm:$0xff] %v485
    %496 = vst [vmem:[%s490 + $0x28] sm:$0xff] %v486
    %497 = vst [vmem:[%s490 + $0x30] sm:$0xff] %v487
    %498 = vst [vmem:[%s490 + $0x38] sm:$0xff] %v488
    // Predicated region
    $region26: #{tpu_custom_call.1} parent=1 // pred_check
      _
    $region27: #{tpu_custom_call.1} parent=1 // pred_check_branch
      %500 = sbr.rel (0) target = $region29
    $region28: #{tpu_custom_call.1} parent=1 // pred_region
      %s502 = ssub.s32 1024, 1024
      %503 = vsyncadd [#allocation4], %s502
      %s505 = sshll.u32 [#allocation8], 4
      %s506 = int_to_ptr.vmem [resolvable:$true] %s505
      %508 = dma.vmem_to_hbm [thread:$0]  %s506, 1024, %s3, [#allocation4]
    $region29: #{tpu_custom_call.1} parent=1 // pred_fallthru
      _
    // Predicated region
    $region30: #{tpu_custom_call.1} parent=1 // pred_check
      _
    $region31: #{tpu_custom_call.1} parent=1 // pred_check_branch
      %510 = sbr.rel (0) target = $region33
    $region32: #{tpu_custom_call.1} parent=1 // pred_region
      %511 = dma.done [#allocation4], 1024
    $region33: #{tpu_custom_call.1} parent=1 // pred_fallthru
      _
    %512 = vsyncpa [#allocation3], 1
    %513 = vsyncpa [#allocation6], 1
    %514 = vsyncpa [#allocation4], 1

</llo_original>
